<compile_context>
chip_gen: v7x
topology: tpu7x:2x2x1
jax: 0.10.0
libtpu: 0.0.40
codegen_flags: <defaults>
</compile_context>

<pallas_src>
import jax
import jax.numpy as jnp
from jax import lax
from jax.experimental import pallas as pl
from jax.experimental.pallas import tpu as pltpu


def _round_up(x, m):
    return ((x + m - 1) // m) * m


def dqn_kernel(x_ref, w1_ref, b1_ref, w2_ref, b2_ref, w3_ref, b3_ref, o_ref):
    # Batch-major: x tile is (TB, n_obs); weights are (out, in); biases (1, out).
    # Contract the feature axis of the activations against the "in" axis of the
    # weights -> no transpose of either operand is materialized.
    dn = (((1,), (1,)), ((), ()))

    x = x_ref[...].astype(w1_ref.dtype)  # cheap VPU cast; makes dot bf16xbf16 when enabled
    h1 = lax.dot_general(x, w1_ref[...], dn, preferred_element_type=jnp.float32)
    h1 = jnp.maximum(h1 + b1_ref[...], 0.0)          # (TB, hid), f32
    h1 = h1.astype(w2_ref.dtype)                      # keep layer-2 dot on the native MXU path

    h2 = lax.dot_general(h1, w2_ref[...], dn, preferred_element_type=jnp.float32)
    h2 = jnp.maximum(h2 + b2_ref[...], 0.0)          # (TB, hid//2), f32
    h2 = h2.astype(w3_ref.dtype)

    out = lax.dot_general(h2, w3_ref[...], dn, preferred_element_type=jnp.float32)
    o_ref[...] = (out + b3_ref[...]).astype(o_ref.dtype)


def dqn_forward(x, params, *, block_b=1024, compute_dtype=None):
    """Fused 3-layer MLP forward. x: (B, n_observations) -> (B, n_actions).

    compute_dtype: optional (e.g. jnp.bfloat16), valid on v5e/v6e/v7x since only
    the MXU touches the low-precision values. Weights are cast here; the x tile
    and intermediates are cast in-kernel; accumulation / bias / ReLU stay f32.
    block_b: max batch tile. Single-TC chips (v5e/v6e) may raise it (e.g. 2048)
    to amortize per-step overhead; the >=2-step cap for v7x is applied anyway.
    """
    w1, b1, w2, b2, w3, b3 = params  # weights (out, in), biases (1, out)
    B, n_obs = x.shape
    hid = w1.shape[0]
    hid_half = w2.shape[0]
    n_actions = w3.shape[0]
    out_dtype = x.dtype

    if compute_dtype is not None:
        w1 = w1.astype(compute_dtype)
        w2 = w2.astype(compute_dtype)
        w3 = w3.astype(compute_dtype)
    # biases stay f32 (they feed the f32 accumulator path)

    # ---- batch tiling (pad only to 128, never to TB) ------------------------
    if B < 256:
        # Single full-extent block: no padding, grid=(1,).
        Bp, TB = B, B
        xp = x
    else:
        Bp = _round_up(B, 128)
        xp = jnp.pad(x, ((0, Bp - B), (0, 0))) if Bp != B else x
        # Cap TB at ceil(Bp/2) so the grid has >= 2 steps -> both TensorCores
        # get work on v7x with dimension_semantics=("parallel",).
        cap = max(128, min(block_b, _round_up((Bp + 1) // 2, 128)))
        TB = 128
        for t in range(256, cap + 1, 128):  # largest 128-multiple divisor of Bp
            if Bp % t == 0:
                TB = t
    grid = (Bp // TB,)

    # ---- explicit VMEM budget ------------------------------------------------
    cbytes = w1.dtype.itemsize
    vmem_need = (
        2 * TB * n_obs * xp.dtype.itemsize                      # x tile (double-buffered)
        + 2 * TB * n_actions * jnp.dtype(out_dtype).itemsize    # out tile (double-buffered)
        + 2 * (w1.size + w2.size + w3.size) * cbytes            # weights (pipeline keeps 2 copies)
        + 2 * (b1.size + b2.size + b3.size) * 4
        + TB * (hid + hid_half) * (4 + cbytes)                  # h1/h2 scratch (f32 + cast copy)
    )
    # Cap at 64 MiB (v7x physical); v5e/v6e (128 MiB) could allow more headroom.
    vmem_limit = max(16 << 20, min(int(1.5 * vmem_need) + (2 << 20), 64 << 20))
    # TODO(synk): constant-index weight blocks are still double-buffered by the
    # default pipeline; pipeline_mode=pl.Buffered(1) could reclaim one copy.

    flops = 2 * Bp * (n_obs * hid + hid * hid_half + hid_half * n_actions)
    bytes_accessed = (
        Bp * n_obs * xp.dtype.itemsize
        + (w1.size + w2.size + w3.size) * cbytes
        + (b1.size + b2.size + b3.size) * 4
        + Bp * n_actions * jnp.dtype(out_dtype).itemsize
    )

    out = pl.pallas_call(
        dqn_kernel,
        out_shape=jax.ShapeDtypeStruct((Bp, n_actions), out_dtype),
        grid_spec=pltpu.PrefetchScalarGridSpec(
            num_scalar_prefetch=0,
            grid=grid,
            in_specs=[
                # batch-tiled input, batch-major (no wrapper transpose)
                pl.BlockSpec((TB, n_obs), lambda i: (i, 0)),
                # weights / biases: same block every step -> VMEM resident
                pl.BlockSpec((hid, n_obs), lambda i: (0, 0)),
                pl.BlockSpec((1, hid), lambda i: (0, 0)),
                pl.BlockSpec((hid_half, hid), lambda i: (0, 0)),
                pl.BlockSpec((1, hid_half), lambda i: (0, 0)),
                pl.BlockSpec((n_actions, hid_half), lambda i: (0, 0)),
                pl.BlockSpec((1, n_actions), lambda i: (0, 0)),
            ],
            out_specs=pl.BlockSpec((TB, n_actions), lambda i: (i, 0)),
        ),
        compiler_params=pltpu.CompilerParams(
            dimension_semantics=("parallel",),  # shard batch tiles across TCs on v7x
            vmem_limit_bytes=vmem_limit,
        ),
        cost_estimate=pl.CostEstimate(
            flops=flops, transcendentals=0, bytes_accessed=bytes_accessed
        ),
    )(xp, w1, b1, w2, b2, w3, b3)

    return out if Bp == B else out[:B]


def init_dqn_params(key, n_observations, n_actions, hid_size, dtype=jnp.float32):
    """Mirrors PyTorch nn.Linear default init (U[-1/sqrt(fan_in), 1/sqrt(fan_in)]).
    Weights stored as (out_features, in_features); biases as (1, out_features)."""
    hid_half = hid_size // 2
    dims = [(n_observations, hid_size), (hid_size, hid_half), (hid_half, n_actions)]
    params = []
    for fan_in, fan_out in dims:
        key, kw, kb = jax.random.split(key, 3)
        bound = 1.0 / (fan_in ** 0.5)
        w = jax.random.uniform(kw, (fan_out, fan_in), dtype, -bound, bound)
        b = jax.random.uniform(kb, (1, fan_out), dtype, -bound, bound)
        params += [w, b]
    return tuple(params)


def dqn_reference(x, params):
    w1, b1, w2, b2, w3, b3 = params
    h1 = jnp.maximum(x @ w1.T + b1, 0.0)
    h2 = jnp.maximum(h1 @ w2.T + b2, 0.0)
    return h2 @ w3.T + b3


if __name__ == "__main__":
    # Small shapes consistent with the module: batch=2, n_obs=4, hid=32, actions=2
    B, n_observations, n_actions, hid_size = 2, 4, 2, 32

    key = jax.random.PRNGKey(0)
    key, kx = jax.random.split(key)
    x = jax.random.normal(kx, (B, n_observations), jnp.float32)
    params = init_dqn_params(key, n_observations, n_actions, hid_size)

    ref = dqn_reference(x, params)

    # f32 path, single-block (no padding) branch
    out = jax.block_until_ready(dqn_forward(x, params))
    assert out.shape == (B, n_actions), out.shape
    assert jnp.allclose(out, ref, atol=1e-5, rtol=1e-5), (out, ref)

    # bf16 MXU path (valid on v5e/v6e/v7x): looser tolerance
    out_bf16 = jax.block_until_ready(dqn_forward(x, params, compute_dtype=jnp.bfloat16))
    assert out_bf16.shape == (B, n_actions), out_bf16.shape
    assert jnp.allclose(out_bf16, ref, atol=5e-2, rtol=5e-2), (out_bf16, ref)

    # exercise the tiled multi-step path (pad-to-128 + >=2 grid steps)
    B2 = 320
    key, kx2 = jax.random.split(key)
    x2 = jax.random.normal(kx2, (B2, n_observations), jnp.float32)
    out2 = jax.block_until_ready(dqn_forward(x2, params))
    ref2 = dqn_reference(x2, params)
    assert out2.shape == (B2, n_actions), out2.shape
    assert jnp.allclose(out2, ref2, atol=1e-5, rtol=1e-5)

    print("KERNEL_OK")
</pallas_src>

<mosaic_0001>
module attributes {stable_mosaic.version = 11 : i64} {
  func.func @dqn_kernel(%arg0: i32, %arg1: memref<2x4xf32, #tpu.memory_space<vmem>>, %arg2: memref<32x4xf32, #tpu.memory_space<vmem>>, %arg3: memref<1x32xf32, #tpu.memory_space<vmem>>, %arg4: memref<16x32xf32, #tpu.memory_space<vmem>>, %arg5: memref<1x16xf32, #tpu.memory_space<vmem>>, %arg6: memref<2x16xf32, #tpu.memory_space<vmem>>, %arg7: memref<1x2xf32, #tpu.memory_space<vmem>>, %arg8: memref<2x2xf32, #tpu.memory_space<vmem>>) attributes {dimension_semantics = [#tpu.dimension_semantics<parallel>], iteration_bounds = array<i64: 1>, scalar_prefetch = 0 : i64, scratch_operands = 0 : i64, tpu.core_type = #tpu.core_type<tc>, window_params = [{transform_indices = @transform_0, window_bounds = array<i64: 2, 4>}, {pipeline_mode = #tpu.pipeline_mode<synchronous>, transform_indices = @transform_1, window_bounds = array<i64: 32, 4>}, {pipeline_mode = #tpu.pipeline_mode<synchronous>, transform_indices = @transform_2, window_bounds = array<i64: 1, 32>}, {pipeline_mode = #tpu.pipeline_mode<synchronous>, transform_indices = @transform_3, window_bounds = array<i64: 16, 32>}, {pipeline_mode = #tpu.pipeline_mode<synchronous>, transform_indices = @transform_4, window_bounds = array<i64: 1, 16>}, {pipeline_mode = #tpu.pipeline_mode<synchronous>, transform_indices = @transform_5, window_bounds = array<i64: 2, 16>}, {pipeline_mode = #tpu.pipeline_mode<synchronous>, transform_indices = @transform_6, window_bounds = array<i64: 1, 2>}, {transform_indices = @transform_7, window_bounds = array<i64: 2, 2>}]} {
    %c0 = arith.constant 0 : index
    %c0_0 = arith.constant 0 : index
    %0 = vector.load %arg1[%c0, %c0_0] : memref<2x4xf32, #tpu.memory_space<vmem>>, vector<2x4xf32>
    %c0_1 = arith.constant 0 : index
    %c0_2 = arith.constant 0 : index
    %1 = vector.load %arg2[%c0_1, %c0_2] : memref<32x4xf32, #tpu.memory_space<vmem>>, vector<32x4xf32>
    %cst = arith.constant dense<0.000000e+00> : vector<2x32xf32>
    %2 = tpu.matmul %0, %1, %cst {dimension_numbers = #tpu.dot_dimension_numbers<[1], [1], [0], [0], [0, 0, 1, 0], [], []>} : vector<2x4xf32>, vector<32x4xf32>, vector<2x32xf32> -> vector<2x32xf32>
    %c0_3 = arith.constant 0 : index
    %c0_4 = arith.constant 0 : index
    %3 = vector.load %arg3[%c0_3, %c0_4] : memref<1x32xf32, #tpu.memory_space<vmem>>, vector<1x32xf32>
    %4 = vector.broadcast %3 : vector<1x32xf32> to vector<2x32xf32>
    %5 = arith.addf %2, %4 : vector<2x32xf32>
    %cst_5 = arith.constant 0.000000e+00 : f32
    %6 = vector.broadcast %cst_5 : f32 to vector<2x32xf32>
    %7 = arith.maximumf %5, %6 : vector<2x32xf32>
    %c0_6 = arith.constant 0 : index
    %c0_7 = arith.constant 0 : index
    %8 = vector.load %arg4[%c0_6, %c0_7] : memref<16x32xf32, #tpu.memory_space<vmem>>, vector<16x32xf32>
    %cst_8 = arith.constant dense<0.000000e+00> : vector<2x16xf32>
    %9 = tpu.matmul %7, %8, %cst_8 {dimension_numbers = #tpu.dot_dimension_numbers<[1], [1], [0], [0], [0, 0, 1, 0], [], []>} : vector<2x32xf32>, vector<16x32xf32>, vector<2x16xf32> -> vector<2x16xf32>
    %c0_9 = arith.constant 0 : index
    %c0_10 = arith.constant 0 : index
    %10 = vector.load %arg5[%c0_9, %c0_10] : memref<1x16xf32, #tpu.memory_space<vmem>>, vector<1x16xf32>
    %11 = vector.broadcast %10 : vector<1x16xf32> to vector<2x16xf32>
    %12 = arith.addf %9, %11 : vector<2x16xf32>
    %cst_11 = arith.constant 0.000000e+00 : f32
    %13 = vector.broadcast %cst_11 : f32 to vector<2x16xf32>
    %14 = arith.maximumf %12, %13 : vector<2x16xf32>
    %c0_12 = arith.constant 0 : index
    %c0_13 = arith.constant 0 : index
    %15 = vector.load %arg6[%c0_12, %c0_13] : memref<2x16xf32, #tpu.memory_space<vmem>>, vector<2x16xf32>
    %cst_14 = arith.constant dense<0.000000e+00> : vector<2x2xf32>
    %16 = tpu.matmul %14, %15, %cst_14 {dimension_numbers = #tpu.dot_dimension_numbers<[1], [1], [0], [0], [0, 0, 1, 0], [], []>} : vector<2x16xf32>, vector<2x16xf32>, vector<2x2xf32> -> vector<2x2xf32>
    %c0_15 = arith.constant 0 : index
    %c0_16 = arith.constant 0 : index
    %17 = vector.load %arg7[%c0_15, %c0_16] : memref<1x2xf32, #tpu.memory_space<vmem>>, vector<1x2xf32>
    %18 = vector.broadcast %17 : vector<1x2xf32> to vector<2x2xf32>
    %19 = arith.addf %16, %18 : vector<2x2xf32>
    %c0_17 = arith.constant 0 : index
    %c0_18 = arith.constant 0 : index
    %20 = vector.load %arg8[%c0_17, %c0_18] : memref<2x2xf32, #tpu.memory_space<vmem>>, vector<2x2xf32>
    tpu.vector_store %arg8[%c0_17, %c0_18], %19 {strides = array<i32>} : memref<2x2xf32, #tpu.memory_space<vmem>>, vector<2x2xf32>,
    return
  }
  func.func @transform_0(%arg0: i32) -> (i32, i32) {
    %c0_i32 = arith.constant 0 : i32
    %c0_i32_0 = arith.constant 0 : i32
    return %arg0, %c0_i32 : i32, i32
  }
  func.func @transform_1(%arg0: i32) -> (i32, i32) {
    %c0_i32 = arith.constant 0 : i32
    %c0_i32_0 = arith.constant 0 : i32
    %c0_i32_1 = arith.constant 0 : i32
    return %c0_i32, %c0_i32_0 : i32, i32
  }
  func.func @transform_2(%arg0: i32) -> (i32, i32) {
    %c0_i32 = arith.constant 0 : i32
    %c0_i32_0 = arith.constant 0 : i32
    %c0_i32_1 = arith.constant 0 : i32
    return %c0_i32, %c0_i32_0 : i32, i32
  }
  func.func @transform_3(%arg0: i32) -> (i32, i32) {
    %c0_i32 = arith.constant 0 : i32
    %c0_i32_0 = arith.constant 0 : i32
    %c0_i32_1 = arith.constant 0 : i32
    return %c0_i32, %c0_i32_0 : i32, i32
  }
  func.func @transform_4(%arg0: i32) -> (i32, i32) {
    %c0_i32 = arith.constant 0 : i32
    %c0_i32_0 = arith.constant 0 : i32
    %c0_i32_1 = arith.constant 0 : i32
    return %c0_i32, %c0_i32_0 : i32, i32
  }
  func.func @transform_5(%arg0: i32) -> (i32, i32) {
    %c0_i32 = arith.constant 0 : i32
    %c0_i32_0 = arith.constant 0 : i32
    %c0_i32_1 = arith.constant 0 : i32
    return %c0_i32, %c0_i32_0 : i32, i32
  }
  func.func @transform_6(%arg0: i32) -> (i32, i32) {
    %c0_i32 = arith.constant 0 : i32
    %c0_i32_0 = arith.constant 0 : i32
    %c0_i32_1 = arith.constant 0 : i32
    return %c0_i32, %c0_i32_0 : i32, i32
  }
  func.func @transform_7(%arg0: i32) -> (i32, i32) {
    %c0_i32 = arith.constant 0 : i32
    %c0_i32_0 = arith.constant 0 : i32
    return %arg0, %c0_i32 : i32, i32
  }
}

</mosaic_0001>

<llo_original>
// kernel: tpu_custom_call.1
$region0: #{tpu_custom_call.1}
  #allocation0 [shape = 'u32[]', space=smem, size = 0x4, offset = 0x4, fixed_abs, tag = 'smem constant byte address 0x4 - core index']
  #allocation1 [shape = 'u32[144,128]{1,0:T(1,128)}', space=vmem, size = 0x12000, scoped, tag = 'internal scratch']
  %s0 = inlined_call_operand.vmem [shape: f32[2,4], index: 0, kind: input, shape index: {}]
  %s1 = inlined_call_operand.vmem [shape: f32[32,4], index: 1, kind: input, shape index: {}]
  %s2 = inlined_call_operand.vmem [shape: f32[1,32], index: 2, kind: input, shape index: {}]
  %s3 = inlined_call_operand.vmem [shape: f32[16,32], index: 3, kind: input, shape index: {}]
  %s4 = inlined_call_operand.vmem [shape: f32[1,16], index: 4, kind: input, shape index: {}]
  %s5 = inlined_call_operand.vmem [shape: f32[2,16], index: 5, kind: input, shape index: {}]
  %s6 = inlined_call_operand.vmem [shape: f32[1,2], index: 6, kind: input, shape index: {}]
  %s7 = inlined_call_operand.hbm [shape: f32[2,2], index: 7, kind: output, shape index: {}]
  %s8 = sld [smem:[#allocation0]]
  $region38: #{tpu_custom_call.1} parent=0
    _
  %s10 = ssub.s32 1, %s8
  %s11 = scalar_select 0, %s10, %s8
  $region1: #{tpu_custom_call.1} parent=0
    #allocation2 [shape = 'u8[1024]{0}', space=vmem, size = 0x400, scoped, tag = 'output window, operand 0, single buffered']
    #allocation3 [shape = 's32[1]{0}', space=sflag, size = 0x4, scoped, tag = 'scoped memory for tpu_custom_call.1']
    %12 = vsyncpa [#allocation3], 0
    // Predicated region
    $region2: #{tpu_custom_call.1} parent=1 // pred_check
      _
    $region3: #{tpu_custom_call.1} parent=1 // pred_check_branch
      %14 = sbr.rel (0) target = $region5
    $region4: #{tpu_custom_call.1} parent=1 // pred_region
      _
    $region5: #{tpu_custom_call.1} parent=1 // pred_fallthru
      _
    // Predicated region
    $region6: #{tpu_custom_call.1} parent=1 // pred_check
      _
    $region7: #{tpu_custom_call.1} parent=1 // pred_check_branch
      %16 = sbr.rel (0) target = $region9
    $region8: #{tpu_custom_call.1} parent=1 // pred_region
      _
    $region9: #{tpu_custom_call.1} parent=1 // pred_fallthru
      _
    // Predicated region
    $region10: #{tpu_custom_call.1} parent=1 // pred_check
      _
    $region11: #{tpu_custom_call.1} parent=1 // pred_check_branch
      %18 = sbr.rel (0) target = $region13
    $region12: #{tpu_custom_call.1} parent=1 // pred_region
      _
    $region13: #{tpu_custom_call.1} parent=1 // pred_fallthru
      _
    // Predicated region
    $region14: #{tpu_custom_call.1} parent=1 // pred_check
      _
    $region15: #{tpu_custom_call.1} parent=1 // pred_check_branch
      %20 = sbr.rel (0) target = $region17
    $region16: #{tpu_custom_call.1} parent=1 // pred_region
      _
    $region17: #{tpu_custom_call.1} parent=1 // pred_fallthru
      _
    // Predicated region
    $region18: #{tpu_custom_call.1} parent=1 // pred_check
      _
    $region19: #{tpu_custom_call.1} parent=1 // pred_check_branch
      %22 = sbr.rel (0) target = $region21
    $region20: #{tpu_custom_call.1} parent=1 // pred_region
      _
    $region21: #{tpu_custom_call.1} parent=1 // pred_fallthru
      _
    // Predicated region
    $region22: #{tpu_custom_call.1} parent=1 // pred_check
      _
    $region23: #{tpu_custom_call.1} parent=1 // pred_check_branch
      %24 = sbr.rel (0) target = $region25
    $region24: #{tpu_custom_call.1} parent=1 // pred_region
      _
    $region25: #{tpu_custom_call.1} parent=1 // pred_fallthru
      _
    // Predicated region
    $region26: #{tpu_custom_call.1} parent=1 // pred_check
      _
    $region27: #{tpu_custom_call.1} parent=1 // pred_check_branch
      %26 = sbr.rel (0) target = $region29
    $region28: #{tpu_custom_call.1} parent=1 // pred_region
      _
    $region29: #{tpu_custom_call.1} parent=1 // pred_fallthru
      _
    %v27 = vld [vmem:[%s0] sm:$0x3]
    %v28 = vld [vmem:[%s1] sm:$0xff]
    %v29 = vld [vmem:[%s1 + $0x8] sm:$0xff]
    %v30 = vld [vmem:[%s1 + $0x10] sm:$0xff]
    %v31 = vld [vmem:[%s1 + $0x18] sm:$0xff]
    %v32 = vld [vmem:[%s2] sm:$0x1]
    %v34 = vlaneseq
    %v35 = vshrl.u32 %v34, 7
    %v36 = vsub.s32 0, %v35
    %v37 = vrot.slane %v32, %v36
    %vm39 = vcmask 31744
    %v41 = vsel %vm39, %v27, 0
    %v44 = vsel %vm39, %v28, 0
    %v47 = vsel %vm39, %v29, 0
    %v50 = vsel %vm39, %v30, 0
    %v53 = vsel %vm39, %v31, 0
    %55 = vmatprep.subr.mxu0 0.0
    %56 = vmatpush1.xpose.msra.mxu0 %v44
    %57 = vmatprep.subr.mxu0 0.0
    %58 = vmatpush1.xpose.msra.mxu0 %v47
    %59 = vmatprep.subr.mxu0 0.0
    %60 = vmatpush1.xpose.msra.mxu0 %v50
    %61 = vmatprep.subr.mxu0 0.0
    %62 = vmatpush1.xpose.msra.mxu0 %v53
    %63 = vmatprep.subr.mxu0 0.0
    %64 = vmatpush1.xpose.msra.mxu0 0.0
    %65 = vmatprep.subr.mxu0 0.0
    %66 = vmatpush1.xpose.msra.mxu0 0.0
    %67 = vmatprep.subr.mxu0 0.0
    %68 = vmatpush1.xpose.msra.mxu0 0.0
    %69 = vmatprep.subr.mxu0 0.0
    %70 = vmatpush1.xpose.msra.mxu0 0.0
    %71 = vmatprep.subr.mxu0 0.0
    %72 = vmatpush1.xpose.msra.mxu0 0.0
    %73 = vmatprep.subr.mxu0 0.0
    %74 = vmatpush1.xpose.msra.mxu0 0.0
    %75 = vmatprep.subr.mxu0 0.0
    %76 = vmatpush1.xpose.msra.mxu0 0.0
    %77 = vmatprep.subr.mxu0 0.0
    %78 = vmatpush1.xpose.msra.mxu0 0.0
    %79 = vmatprep.subr.mxu0 0.0
    %80 = vmatpush1.xpose.msra.mxu0 0.0
    %81 = vmatprep.subr.mxu0 0.0
    %82 = vmatpush1.xpose.msra.mxu0 0.0
    %83 = vmatprep.subr.mxu0 0.0
    %84 = vmatpush1.xpose.msra.mxu0 0.0
    %85 = vmatprep.subr.mxu0 0.0
    %86 = vmatpush1.xpose.msra.mxu0 0.0
    %87 = vmatprep.subr.mxu0 0.0
    %88 = vmatpush1.xpose.msra.mxu0 0.0
    %89 = vmatprep.subr.mxu0 0.0
    %90 = vmatpush1.xpose.msra.mxu0 0.0
    %91 = vmatprep.subr.mxu0 0.0
    %92 = vmatpush1.xpose.msra.mxu0 0.0
    %93 = vmatprep.subr.mxu0 0.0
    %94 = vmatpush1.xpose.msra.mxu0 0.0
    %95 = vmatprep.subr.mxu0 0.0
    %96 = vmatpush1.xpose.msra.mxu0 0.0
    %97 = vmatprep.subr.mxu0 0.0
    %98 = vmatpush1.xpose.msra.mxu0 0.0
    %99 = vmatprep.subr.mxu0 0.0
    %100 = vmatpush1.xpose.msra.mxu0 0.0
    %101 = vmatprep.subr.mxu0 0.0
    %102 = vmatpush1.xpose.msra.mxu0 0.0
    %103 = vmatprep.subr.mxu0 0.0
    %104 = vmatpush1.xpose.msra.mxu0 0.0
    %105 = vmatprep.subr.mxu0 0.0
    %106 = vmatpush1.xpose.msra.mxu0 0.0
    %107 = vmatprep.subr.mxu0 0.0
    %108 = vmatpush1.xpose.msra.mxu0 0.0
    %109 = vmatprep.subr.mxu0 0.0
    %110 = vmatpush1.xpose.msra.mxu0 0.0
    %111 = vmatprep.subr.mxu0 0.0
    %112 = vmatpush1.xpose.msra.mxu0 0.0
    %113 = vmatprep.subr.mxu0 0.0
    %114 = vmatpush1.xpose.msra.mxu0 0.0
    %115 = vmatprep.subr.mxu0 0.0
    %116 = vmatpush1.xpose.msra.mxu0 0.0
    %117 = vmatprep.subr.mxu0 0.0
    %118 = vmatpush1.xpose.msra.mxu0 0.0
    %119 = vmatprep.mubr.f32.mxu0 0.0
    %120 = vmatmul.mubr.f32.gmra.mrb[0].mxu0 %v41
    %v121 = vpop.f32.mrb[0].mxu0
    %v122 = vadd.f32 %v37, %v121
    %v123 = vpop.f32.mrb[0].mxu0
    %124 = vdwg.mxu0
    %v125 = vmax.f32 %v122, 0.0
    %v126 = vld [vmem:[%s3] sm:$0xff]
    %v127 = vld [vmem:[%s3 + $0x8] sm:$0xff]
    %v128 = vld [vmem:[%s4] sm:$0x1]
    %v130 = vlaneseq
    %v131 = vshrl.u32 %v130, 7
    %v132 = vsub.s32 0, %v131
    %v133 = vrot.slane %v128, %v132
    %vm135 = vcmask 261120
    %v137 = vsel %vm135, %v125, 0
    %v140 = vsel %vm135, %v126, 0
    %v143 = vsel %vm135, %v127, 0
    %145 = vmatprep.subr.mxu0 0.0
    %146 = vmatpush1.xpose.msra.mxu0 %v140
    %147 = vmatprep.subr.mxu0 0.0
    %148 = vmatpush1.xpose.msra.mxu0 %v143
    %149 = vmatprep.subr.mxu0 0.0
    %150 = vmatpush1.xpose.msra.mxu0 0.0
    %151 = vmatprep.subr.mxu0 0.0
    %152 = vmatpush1.xpose.msra.mxu0 0.0
    %153 = vmatprep.subr.mxu0 0.0
    %154 = vmatpush1.xpose.msra.mxu0 0.0
    %155 = vmatprep.subr.mxu0 0.0
    %156 = vmatpush1.xpose.msra.mxu0 0.0
    %157 = vmatprep.subr.mxu0 0.0
    %158 = vmatpush1.xpose.msra.mxu0 0.0
    %159 = vmatprep.subr.mxu0 0.0
    %160 = vmatpush1.xpose.msra.mxu0 0.0
    %161 = vmatprep.subr.mxu0 0.0
    %162 = vmatpush1.xpose.msra.mxu0 0.0
    %163 = vmatprep.subr.mxu0 0.0
    %164 = vmatpush1.xpose.msra.mxu0 0.0
    %165 = vmatprep.subr.mxu0 0.0
    %166 = vmatpush1.xpose.msra.mxu0 0.0
    %167 = vmatprep.subr.mxu0 0.0
    %168 = vmatpush1.xpose.msra.mxu0 0.0
    %169 = vmatprep.subr.mxu0 0.0
    %170 = vmatpush1.xpose.msra.mxu0 0.0
    %171 = vmatprep.subr.mxu0 0.0
    %172 = vmatpush1.xpose.msra.mxu0 0.0
    %173 = vmatprep.subr.mxu0 0.0
    %174 = vmatpush1.xpose.msra.mxu0 0.0
    %175 = vmatprep.subr.mxu0 0.0
    %176 = vmatpush1.xpose.msra.mxu0 0.0
    %177 = vmatprep.subr.mxu0 0.0
    %178 = vmatpush1.xpose.msra.mxu0 0.0
    %179 = vmatprep.subr.mxu0 0.0
    %180 = vmatpush1.xpose.msra.mxu0 0.0
    %181 = vmatprep.subr.mxu0 0.0
    %182 = vmatpush1.xpose.msra.mxu0 0.0
    %183 = vmatprep.subr.mxu0 0.0
    %184 = vmatpush1.xpose.msra.mxu0 0.0
    %185 = vmatprep.subr.mxu0 0.0
    %186 = vmatpush1.xpose.msra.mxu0 0.0
    %187 = vmatprep.subr.mxu0 0.0
    %188 = vmatpush1.xpose.msra.mxu0 0.0
    %189 = vmatprep.subr.mxu0 0.0
    %190 = vmatpush1.xpose.msra.mxu0 0.0
    %191 = vmatprep.subr.mxu0 0.0
    %192 = vmatpush1.xpose.msra.mxu0 0.0
    %193 = vmatprep.subr.mxu0 0.0
    %194 = vmatpush1.xpose.msra.mxu0 0.0
    %195 = vmatprep.subr.mxu0 0.0
    %196 = vmatpush1.xpose.msra.mxu0 0.0
    %197 = vmatprep.subr.mxu0 0.0
    %198 = vmatpush1.xpose.msra.mxu0 0.0
    %199 = vmatprep.subr.mxu0 0.0
    %200 = vmatpush1.xpose.msra.mxu0 0.0
    %201 = vmatprep.subr.mxu0 0.0
    %202 = vmatpush1.xpose.msra.mxu0 0.0
    %203 = vmatprep.subr.mxu0 0.0
    %204 = vmatpush1.xpose.msra.mxu0 0.0
    %205 = vmatprep.subr.mxu0 0.0
    %206 = vmatpush1.xpose.msra.mxu0 0.0
    %207 = vmatprep.subr.mxu0 0.0
    %208 = vmatpush1.xpose.msra.mxu0 0.0
    %209 = vmatprep.mubr.f32.mxu0 0.0
    %210 = vmatmul.mubr.f32.gmra.mrb[0].mxu0 %v137
    %v211 = vpop.f32.mrb[0].mxu0
    %v212 = vadd.f32 %v133, %v211
    %v213 = vpop.f32.mrb[0].mxu0
    %214 = vdwg.mxu0
    %v215 = vmax.f32 %v212, 0.0
    %v216 = vld [vmem:[%s5] sm:$0x3]
    %v217 = vld [vmem:[%s6] sm:$0x1]
    %v219 = vlaneseq
    %v220 = vshrl.u32 %v219, 7
    %v221 = vsub.s32 0, %v220
    %v222 = vrot.slane %v217, %v221
    %vm224 = vcmask 130048
    %v226 = vsel %vm224, %v215, 0
    %v229 = vsel %vm224, %v216, 0
    %231 = vmatprep.subr.mxu0 0.0
    %232 = vmatpush1.xpose.msra.mxu0 %v229
    %233 = vmatprep.subr.mxu0 0.0
    %234 = vmatpush1.xpose.msra.mxu0 0.0
    %235 = vmatprep.subr.mxu0 0.0
    %236 = vmatpush1.xpose.msra.mxu0 0.0
    %237 = vmatprep.subr.mxu0 0.0
    %238 = vmatpush1.xpose.msra.mxu0 0.0
    %239 = vmatprep.subr.mxu0 0.0
    %240 = vmatpush1.xpose.msra.mxu0 0.0
    %241 = vmatprep.subr.mxu0 0.0
    %242 = vmatpush1.xpose.msra.mxu0 0.0
    %243 = vmatprep.subr.mxu0 0.0
    %244 = vmatpush1.xpose.msra.mxu0 0.0
    %245 = vmatprep.subr.mxu0 0.0
    %246 = vmatpush1.xpose.msra.mxu0 0.0
    %247 = vmatprep.subr.mxu0 0.0
    %248 = vmatpush1.xpose.msra.mxu0 0.0
    %249 = vmatprep.subr.mxu0 0.0
    %250 = vmatpush1.xpose.msra.mxu0 0.0
    %251 = vmatprep.subr.mxu0 0.0
    %252 = vmatpush1.xpose.msra.mxu0 0.0
    %253 = vmatprep.subr.mxu0 0.0
    %254 = vmatpush1.xpose.msra.mxu0 0.0
    %255 = vmatprep.subr.mxu0 0.0
    %256 = vmatpush1.xpose.msra.mxu0 0.0
    %257 = vmatprep.subr.mxu0 0.0
    %258 = vmatpush1.xpose.msra.mxu0 0.0
    %259 = vmatprep.subr.mxu0 0.0
    %260 = vmatpush1.xpose.msra.mxu0 0.0
    %261 = vmatprep.subr.mxu0 0.0
    %262 = vmatpush1.xpose.msra.mxu0 0.0
    %263 = vmatprep.subr.mxu0 0.0
    %264 = vmatpush1.xpose.msra.mxu0 0.0
    %265 = vmatprep.subr.mxu0 0.0
    %266 = vmatpush1.xpose.msra.mxu0 0.0
    %267 = vmatprep.subr.mxu0 0.0
    %268 = vmatpush1.xpose.msra.mxu0 0.0
    %269 = vmatprep.subr.mxu0 0.0
    %270 = vmatpush1.xpose.msra.mxu0 0.0
    %271 = vmatprep.subr.mxu0 0.0
    %272 = vmatpush1.xpose.msra.mxu0 0.0
    %273 = vmatprep.subr.mxu0 0.0
    %274 = vmatpush1.xpose.msra.mxu0 0.0
    %275 = vmatprep.subr.mxu0 0.0
    %276 = vmatpush1.xpose.msra.mxu0 0.0
    %277 = vmatprep.subr.mxu0 0.0
    %278 = vmatpush1.xpose.msra.mxu0 0.0
    %279 = vmatprep.subr.mxu0 0.0
    %280 = vmatpush1.xpose.msra.mxu0 0.0
    %281 = vmatprep.subr.mxu0 0.0
    %282 = vmatpush1.xpose.msra.mxu0 0.0
    %283 = vmatprep.subr.mxu0 0.0
    %284 = vmatpush1.xpose.msra.mxu0 0.0
    %285 = vmatprep.subr.mxu0 0.0
    %286 = vmatpush1.xpose.msra.mxu0 0.0
    %287 = vmatprep.subr.mxu0 0.0
    %288 = vmatpush1.xpose.msra.mxu0 0.0
    %289 = vmatprep.subr.mxu0 0.0
    %290 = vmatpush1.xpose.msra.mxu0 0.0
    %291 = vmatprep.subr.mxu0 0.0
    %292 = vmatpush1.xpose.msra.mxu0 0.0
    %293 = vmatprep.subr.mxu0 0.0
    %294 = vmatpush1.xpose.msra.mxu0 0.0
    %295 = vmatprep.mubr.f32.mxu0 0.0
    %296 = vmatmul.mubr.f32.gmra.mrb[0].mxu0 %v226
    %v297 = vpop.f32.mrb[0].mxu0
    %v298 = vadd.f32 %v222, %v297
    %v299 = vpop.f32.mrb[0].mxu0
    %300 = vdwg.mxu0
    %vm301 = vcmask 9216
    %302 = vst.msk [vmem:[#allocation2] sm:$0x3] %vm301, %v298
    // Predicated region
    $region30: #{tpu_custom_call.1} parent=1 // pred_check
      _
    $region31: #{tpu_custom_call.1} parent=1 // pred_check_branch
      %304 = sbr.rel (0) target = $region33
    $region32: #{tpu_custom_call.1} parent=1 // pred_region
      %s306 = ssub.s32 32, 32
      %307 = vsyncadd [#allocation3], %s306
      %s309 = sshll.u32 [#allocation2], 4
      %s310 = int_to_ptr.vmem [resolvable:$true] %s309
      %312 = dma.vmem_to_hbm [thread:$0]  %s310, 32, %s7, [#allocation3]
    $region33: #{tpu_custom_call.1} parent=1 // pred_fallthru
      _
    // Predicated region
    $region34: #{tpu_custom_call.1} parent=1 // pred_check
      _
    $region35: #{tpu_custom_call.1} parent=1 // pred_check_branch
      %314 = sbr.rel (0) target = $region37
    $region36: #{tpu_custom_call.1} parent=1 // pred_region
      %315 = dma.done [#allocation3], 32
    $region37: #{tpu_custom_call.1} parent=1 // pred_fallthru
      _
    %316 = vsyncpa [#allocation3], 1

</llo_original>
